<compile_context>
chip_gen: v6e
topology: v6e:2x2x1
jax: 0.10.0
libtpu: 0.0.40
codegen_flags: <defaults>
</compile_context>

<pallas_src>
import math

import jax
import jax.numpy as jnp
from jax.experimental import pallas as pl
from jax.experimental.pallas import tpu as pltpu


def _fused_butterfly_matmul_kernel(x_ref, w_ref, o_ref):
    # x_ref : VMEM (bt, Kp)  f32 — packed input rows (G batch rows per lane-row)
    # w_ref : VMEM (Kp, Np)  f32 — fused block-diagonal butterfly matrix (grid-invariant)
    # o_ref : VMEM (bt, Np)  f32 — lane-dense output tile
    o_ref[...] = jnp.dot(
        x_ref[...], w_ref[...], preferred_element_type=jnp.float32
    ).astype(o_ref.dtype)


def _butterfly_levels(twiddle, x):
    """Level-by-level all-in-one butterfly product (real case, increasing stride).

    twiddle: (rank, n-1, 2, 2) f32, x: (B, n) f32  ->  (B, rank, n) f32.
    Pure elementwise f32 math (no dots), used both as the reference and to build
    the fused mixing matrix (applied to the identity).
    """
    rank = twiddle.shape[0]
    n = twiddle.shape[1] + 1
    B = x.shape[0]
    m = int(math.log2(n))
    out = jnp.broadcast_to(x[:, None, :], (B, rank, n)).astype(jnp.float32)
    for log_stride in range(m):
        stride = 1 << log_stride
        t = twiddle[:, stride - 1:2 * stride - 1]            # (rank, stride, 2, 2)
        o = out.reshape(B, rank, n // (2 * stride), 2, stride)
        o0 = o[:, :, :, 0, :]                                # (B, rank, C, stride)
        o1 = o[:, :, :, 1, :]
        t00 = t[:, :, 0, 0][None, :, None, :]
        t01 = t[:, :, 0, 1][None, :, None, :]
        t10 = t[:, :, 1, 0][None, :, None, :]
        t11 = t[:, :, 1, 1][None, :, None, :]
        new0 = t00 * o0 + t01 * o1
        new1 = t10 * o0 + t11 * o1
        out = jnp.stack([new0, new1], axis=3).reshape(B, rank, n)
    return out


def block2x2_diag_product_allinone_forward(x, twiddle, *, bt_max=512, interpret=False):
    """Pallas forward for Block2x2DiagProductAllinOne (real case).

    x: (batch, size) ; twiddle: (rank, size-1, 2, 2)  ->  (batch, rank*size)
    """
    assert x.ndim == 2, "real input must be (batch, size)"
    B, n = x.shape
    rank = twiddle.shape[0]
    assert twiddle.shape == (rank, n - 1, 2, 2), "twiddle must be (rank, size-1, 2, 2)"
    assert n >= 2 and (n & (n - 1)) == 0, "size must be a power of 2"

    xf = x.astype(jnp.float32)
    tw = twiddle.astype(jnp.float32)

    # ---- parameter glue: fold all log2(n) butterfly factors (all ranks) into one
    #      dense mixing matrix. W[i, r*n + j] = (butterfly_r)[j, i]  (batch-independent).
    w = _butterfly_levels(tw, jnp.eye(n, dtype=jnp.float32))     # (n, rank, n)
    w = w.reshape(n, rank * n)

    # ---- lane-dense packing: G batch rows side by side on the 128-lane axis,
    #      block-diagonal kron(I_G, W) -> unmasked full-lane loads/stores.
    G = 128 // n if n < 128 else 1
    Kp = G * n                                                   # multiple of 128
    Np = G * rank * n                                            # multiple of 128
    wp = jnp.kron(jnp.eye(G, dtype=jnp.float32), w)              # (Kp, Np)

    # ---- batch tiling: large sublane-aligned tiles, pad batch (no bt=B fallback).
    rows = -(-B // G)                                            # packed rows
    rows_up8 = ((rows + 7) // 8) * 8
    bt = min(bt_max, rows_up8)
    # keep >=2 parallel grid steps when possible so both v7x TensorCores get work
    if rows > 8 and bt >= rows_up8:
        bt = max(8, ((((rows + 1) // 2) + 7) // 8) * 8)
    rows_pad = -(-rows // bt) * bt
    b_pad = rows_pad * G

    xpad = jnp.zeros((b_pad, n), jnp.float32).at[:B].set(xf)
    xp = xpad.reshape(rows_pad, Kp)

    grid = (rows_pad // bt,)
    out_p = pl.pallas_call(
        _fused_butterfly_matmul_kernel,
        out_shape=jax.ShapeDtypeStruct((rows_pad, Np), jnp.float32),
        grid=grid,
        in_specs=[
            pl.BlockSpec((bt, Kp), lambda i: (i, 0)),            # streamed x tile
            pl.BlockSpec((Kp, Np), lambda i: (0, 0)),            # fused W, grid-invariant
        ],
        out_specs=pl.BlockSpec((bt, Np), lambda i: (i, 0)),
        compiler_params=pltpu.CompilerParams(
            dimension_semantics=("parallel",),
        ),
        interpret=interpret,
    )(xp, wp)

    out = out_p.reshape(b_pad, rank * n)[:B]
    return out.astype(x.dtype)


def block2x2_diag_product_allinone_reference(x, twiddle):
    """Pure-JAX reference mirroring the PyTorch module's forward (real case)."""
    B, n = x.shape
    rank = twiddle.shape[0]
    out = _butterfly_levels(twiddle.astype(jnp.float32), x.astype(jnp.float32))
    return out.reshape(B, rank * n).astype(x.dtype)


if __name__ == "__main__":
    key = jax.random.PRNGKey(0)
    k_tw, k_x = jax.random.split(key)

    size = 32                                   # power of 2
    rank = 2
    batch = 200                                 # exercises packing + padding + multi-step grid
    scaling = 1.0 / math.sqrt(2)                # matches nn.Parameter(torch.randn(...)*scaling)
    twiddle = jax.random.normal(k_tw, (rank, size - 1, 2, 2), dtype=jnp.float32) * scaling
    x = jax.random.normal(k_x, (batch, size), dtype=jnp.float32)

    # small bt_max so the tiny demo still runs a multi-step pipelined, padded grid;
    # production default (bt_max=512) uses 512-row tiles (fits v5e/v6e/v7x VMEM easily).
    out = block2x2_diag_product_allinone_forward(x, twiddle, bt_max=16)
    out = jax.block_until_ready(out)

    ref = block2x2_diag_product_allinone_reference(x, twiddle)
    assert out.shape == (batch, rank * size)
    max_err = float(jnp.max(jnp.abs(out - ref)))
    assert jnp.allclose(out, ref, atol=5e-4, rtol=5e-4), f"Pallas mismatch, max abs err={max_err}"

    print("KERNEL_OK")
</pallas_src>

<mosaic_0001>
module attributes {stable_mosaic.version = 11 : i64} {
  func.func @_fused_butterfly_matmul_kernel(%arg0: i32, %arg1: memref<16x128xf32, #tpu.memory_space<vmem>>, %arg2: memref<128x256xf32, #tpu.memory_space<vmem>>, %arg3: memref<16x256xf32, #tpu.memory_space<vmem>>) attributes {dimension_semantics = [#tpu.dimension_semantics<parallel>], iteration_bounds = array<i64: 4>, scalar_prefetch = 0 : i64, scratch_operands = 0 : i64, tpu.core_type = #tpu.core_type<tc>, window_params = [{transform_indices = @transform_0, window_bounds = array<i64: 16, 128>}, {pipeline_mode = #tpu.pipeline_mode<synchronous>, transform_indices = @transform_1, window_bounds = array<i64: 128, 256>}, {transform_indices = @transform_2, window_bounds = array<i64: 16, 256>}]} {
    %c0 = arith.constant 0 : index
    %c0_0 = arith.constant 0 : index
    %0 = vector.load %arg1[%c0, %c0_0] : memref<16x128xf32, #tpu.memory_space<vmem>>, vector<16x128xf32>
    %c0_1 = arith.constant 0 : index
    %c0_2 = arith.constant 0 : index
    %1 = vector.load %arg2[%c0_1, %c0_2] : memref<128x256xf32, #tpu.memory_space<vmem>>, vector<128x256xf32>
    %cst = arith.constant dense<0.000000e+00> : vector<16x256xf32>
    %2 = tpu.matmul %0, %1, %cst {dimension_numbers = #tpu.dot_dimension_numbers<[1], [0], [0], [1], [0, 0, 1, 1], [], []>} : vector<16x128xf32>, vector<128x256xf32>, vector<16x256xf32> -> vector<16x256xf32>
    %c0_3 = arith.constant 0 : index
    %c0_4 = arith.constant 0 : index
    %3 = vector.load %arg3[%c0_3, %c0_4] : memref<16x256xf32, #tpu.memory_space<vmem>>, vector<16x256xf32>
    tpu.vector_store %arg3[%c0_3, %c0_4], %2 {strides = array<i32>} : memref<16x256xf32, #tpu.memory_space<vmem>>, vector<16x256xf32>,
    return
  }
  func.func @transform_0(%arg0: i32) -> (i32, i32) {
    %c0_i32 = arith.constant 0 : i32
    %c0_i32_0 = arith.constant 0 : i32
    return %arg0, %c0_i32 : i32, i32
  }
  func.func @transform_1(%arg0: i32) -> (i32, i32) {
    %c0_i32 = arith.constant 0 : i32
    %c0_i32_0 = arith.constant 0 : i32
    %c0_i32_1 = arith.constant 0 : i32
    return %c0_i32, %c0_i32_0 : i32, i32
  }
  func.func @transform_2(%arg0: i32) -> (i32, i32) {
    %c0_i32 = arith.constant 0 : i32
    %c0_i32_0 = arith.constant 0 : i32
    return %arg0, %c0_i32 : i32, i32
  }
}

</mosaic_0001>

<llo_original>
// kernel: tpu_custom_call.1
$region0: #{tpu_custom_call.1}
  #allocation0 [shape = 'u32[]', space=smem, size = 0x4, offset = 0x4, fixed_abs, tag = 'smem constant byte address 0x4 - core index']
  #allocation1 [shape = 'u32[144,128]{1,0:T(1,128)}', space=vmem, size = 0x12000, scoped, tag = 'internal scratch']
  %s0 = inlined_call_operand.hbm [shape: f32[64,128], index: 0, kind: input, shape index: {}]
  %s1 = inlined_call_operand.hbm [shape: f32[128,256], index: 1, kind: input, shape index: {}]
  %s2 = inlined_call_operand.hbm [shape: f32[64,256], index: 2, kind: output, shape index: {}]
  %s3 = sld [smem:[#allocation0]]
  $region49: #{tpu_custom_call.1} parent=0
    _
  %s5 = ssub.s32 1, %s3
  %s6 = scalar_select 0, %s5, %s3
  $region1: #{tpu_custom_call.1} parent=0
    #allocation2 [shape = 'u8[16384]{0}', space=vmem, size = 0x4000, scoped, tag = 'input window, operand 0']
    #allocation3 [shape = 's32[2]{0}', space=sflag, size = 0x8, scoped, tag = 'scoped memory for tpu_custom_call.1']
    #allocation4 [shape = 's32[2]{0}', space=sflag, size = 0x8, scoped, tag = 'scoped memory for tpu_custom_call.1']
    #allocation5 [shape = 'u8[131072]{0}', space=vmem, size = 0x20000, scoped, tag = 'input window, operand 1, single buffered']
    #allocation6 [shape = 's32[1]{0}', space=sflag, size = 0x4, scoped, tag = 'scoped memory for tpu_custom_call.1']
    #allocation7 [shape = 'u8[32768]{0}', space=vmem, size = 0x8000, scoped, tag = 'output window, operand 0']
    %7 = vsyncpa [#allocation3], 0
    %s8 = scalar_lea.sflag [#allocation3], 1
    %9 = vsyncpa %s8, 0
    %10 = vsyncpa [#allocation6], 0
    %11 = vsyncpa [#allocation4], 0
    %s12 = scalar_lea.sflag [#allocation4], 1
    %13 = vsyncpa %s12, 0
    loop: start=0, step=1, limit=6
    $region2: #{tpu_custom_call.1} parent=1 // loop_pre_header
      _
    $region3: #{tpu_custom_call.1} parent=1 // loop_header
      %s15 = sphi 0, %s19
      %p16 = scmp.ge.s32.totalorder %s15, 6
      %s25 = sphi 0, %s27
      %s28 = sphi 0, %s25
      %s29 = sphi 0, %s28
      %s45 = sphi 0, %s29
      %s49 = sphi 0, %s49
      %s51 = sphi 0, %s49
      %s52 = sphi 0, %s51
      %s66 = sphi 0, %s52
      %s72 = sphi 0, %s74
      %s75 = sphi 0, %s72
      %s76 = sphi 0, %s75
      %s92 = sphi 0, %s76
    $region4: #{tpu_custom_call.1} parent=1 // loop_header_branch
      %18 = sbr.rel (%p16) target = $region8
    $region5: #{tpu_custom_call.1} parent=1 // loop_body
      %s20 = ssub.s32 %s15, 1
      %s21 = ssub.s32 %s15, 2
      %s22 = sadd.s32 %s15, 1
      %s23 = ssub.s32 %s15, %s22
      %p24 = scmp.eq.s32.totalorder %s23, 0
      %s26 = sadd.s32 %s25, 1
      %s27 = scalar_select %p24, %s25, %s26
      %p30 = pneg %p24
      %p31 = scmp.eq.s32.totalorder %s15, 3
      %p32 = por %p30, %p31
      %p33 = scmp.ne.s32.totalorder %s25, %s28
      %p34 = scmp.eq.s32.totalorder %s15, 0
      %p35 = por %p33, %p34
      %p36 = scmp.ne.s32.totalorder %s25, %s28
      %p37 = scmp.eq.s32.totalorder %s20, 3
      %p38 = por %p36, %p37
      %p39 = scmp.ne.s32.totalorder %s28, %s29
      %p40 = scmp.eq.s32.totalorder %s20, 0
      %p41 = por %p39, %p40
      %p42 = scmp.ne.s32.totalorder %s28, %s29
      %p43 = scmp.eq.s32.totalorder %s21, 3
      %p44 = por %p42, %p43
      %p46 = scmp.ne.s32.totalorder %s29, %s45
      %p47 = scmp.eq.s32.totalorder %s21, 0
      %p48 = por %p46, %p47
      %s50 = sadd.s32 %s49, 1
      %p53 = scmp.eq.s32.totalorder %s15, 3
      %p54 = scmp.ne.s32.totalorder %s49, %s51
      %p55 = scmp.eq.s32.totalorder %s15, 0
      %p56 = por %p54, %p55
      %p57 = scmp.ne.s32.totalorder %s49, %s51
      %p58 = scmp.eq.s32.totalorder %s20, 3
      %p59 = por %p57, %p58
      %p60 = scmp.ne.s32.totalorder %s51, %s52
      %p61 = scmp.eq.s32.totalorder %s20, 0
      %p62 = por %p60, %p61
      %p63 = scmp.ne.s32.totalorder %s51, %s52
      %p64 = scmp.eq.s32.totalorder %s21, 3
      %p65 = por %p63, %p64
      %p67 = scmp.ne.s32.totalorder %s52, %s66
      %p68 = scmp.eq.s32.totalorder %s21, 0
      %p69 = por %p67, %p68
      %s70 = ssub.s32 %s15, %s22
      %p71 = scmp.eq.s32.totalorder %s70, 0
      %s73 = sadd.s32 %s72, 1
      %s74 = scalar_select %p71, %s72, %s73
      %p77 = pneg %p71
      %p78 = scmp.eq.s32.totalorder %s15, 3
      %p79 = por %p77, %p78
      %p80 = scmp.ne.s32.totalorder %s72, %s75
      %p81 = scmp.eq.s32.totalorder %s15, 0
      %p82 = por %p80, %p81
      %p83 = scmp.ne.s32.totalorder %s72, %s75
      %p84 = scmp.eq.s32.totalorder %s20, 3
      %p85 = por %p83, %p84
      %p86 = scmp.ne.s32.totalorder %s75, %s76
      %p87 = scmp.eq.s32.totalorder %s20, 0
      %p88 = por %p86, %p87
      %p89 = scmp.ne.s32.totalorder %s75, %s76
      %p90 = scmp.eq.s32.totalorder %s21, 3
      %p91 = por %p89, %p90
      %p93 = scmp.ne.s32.totalorder %s76, %s92
      %p94 = scmp.eq.s32.totalorder %s21, 0
      %p95 = por %p93, %p94
      %p96 = scmp.le.s32.totalorder 1, %s15
      %p97 = scmp.lt.s32.totalorder %s15, 5
      %p98 = pnand %p96, %p97
      %p99 = pneg %p98
      // Predicated region
      $region9: #{tpu_custom_call.1} parent=5 // pred_check
        _
      $region10: #{tpu_custom_call.1} parent=5 // pred_check_branch
        %101 = sbr.rel (%p98) target = $region12
      $region11: #{tpu_custom_call.1} parent=5 // pred_region
        %s102 = ssub.s32 %s15, 1
        // Predicated region
        $region13: #{tpu_custom_call.1} parent=11 // pred_check
          %p103 = pneg %p62
        $region14: #{tpu_custom_call.1} parent=11 // pred_check_branch
          %105 = sbr.rel (%p103) target = $region16
        $region15: #{tpu_custom_call.1} parent=11 // pred_region
          %s107 = ssub.s32 4096, 4096
          %108 = vsyncadd [#allocation6], %s107
          %s109 = sshll.u32 [#allocation5], 4
          %s110 = int_to_ptr.vmem [resolvable:$true] %s109
          %115 = dma.hbm_to_vmem [thread:$0]  %s1, 4096, %s110, [#allocation6], 256, 256, 16
        $region16: #{tpu_custom_call.1} parent=11 // pred_fallthru
          _
      $region12: #{tpu_custom_call.1} parent=5 // pred_fallthru
        _
      %p116 = scmp.lt.s32.totalorder %s15, 4
      // Predicated region
      $region17: #{tpu_custom_call.1} parent=5 // pred_check
        %p117 = pneg %p116
      $region18: #{tpu_custom_call.1} parent=5 // pred_check_branch
        %119 = sbr.rel (%p117) target = $region20
      $region19: #{tpu_custom_call.1} parent=5 // pred_region
        // Predicated region
        $region21: #{tpu_custom_call.1} parent=19 // pred_check
          %p120 = pneg %p35
        $region22: #{tpu_custom_call.1} parent=19 // pred_check_branch
          %122 = sbr.rel (%p120) target = $region24
        $region23: #{tpu_custom_call.1} parent=19 // pred_region
          %s123 = sand.u32 %s25, 1
          %s124 = scalar_lea.sflag [#allocation3], %s123
          %s125 = sand.u32 %s25, 1
          %s126 = smul.addr %s125, 16
          %s127 = scalar_lea.vmem [#allocation2], %s126
          %s128 = smul.u32 2, %s15
          %s130 = ssub.s32 256, 256
          %131 = vsyncadd %s124, %s130
          %s132 = smul.addr %s128, 128
          %s133 = scalar_lea.hbm %s0, %s132
          %s134 = sshll.u32 %s127, 4
          %s135 = int_to_ptr.vmem [resolvable:$true] %s134
          %140 = dma.hbm_to_vmem [thread:$0]  %s133, 256, %s135, %s124, 128, 128, 8
        $region24: #{tpu_custom_call.1} parent=19 // pred_fallthru
          _
      $region20: #{tpu_custom_call.1} parent=5 // pred_fallthru
        _
      %p141 = scmp.le.s32.totalorder 1, %s15
      %p142 = scmp.lt.s32.totalorder %s15, 5
      %p143 = pnand %p141, %p142
      %p144 = pneg %p143
      // Predicated region
      $region25: #{tpu_custom_call.1} parent=5 // pred_check
        _
      $region26: #{tpu_custom_call.1} parent=5 // pred_check_branch
        %146 = sbr.rel (%p143) target = $region28
      $region27: #{tpu_custom_call.1} parent=5 // pred_region
        %s147 = ssub.s32 %s15, 1
        %s148 = sand.u32 %s28, 1
        %s149 = scalar_lea.sflag [#allocation3], %s148
        %s150 = sand.u32 %s28, 1
        %s151 = smul.addr %s150, 16
        %s152 = scalar_lea.vmem [#allocation2], %s151
        // Predicated region
        $region29: #{tpu_custom_call.1} parent=27 // pred_check
          %p153 = pneg %p41
        $region30: #{tpu_custom_call.1} parent=27 // pred_check_branch
          %155 = sbr.rel (%p153) target = $region32
        $region31: #{tpu_custom_call.1} parent=27 // pred_region
          %156 = dma.done %s149, 256
        $region32: #{tpu_custom_call.1} parent=27 // pred_fallthru
          _
        // Predicated region
        $region33: #{tpu_custom_call.1} parent=27 // pred_check
          %p157 = pneg %p62
        $region34: #{tpu_custom_call.1} parent=27 // pred_check_branch
          %159 = sbr.rel (%p157) target = $region36
        $region35: #{tpu_custom_call.1} parent=27 // pred_region
          %160 = dma.done [#allocation6], 4096
        $region36: #{tpu_custom_call.1} parent=27 // pred_fallthru
          _
        %s161 = sand.u32 %s28, 1
        %s162 = scalar_lea.sflag [#allocation3], %s161
        %s163 = sand.u32 %s28, 1
        %s164 = smul.addr %s163, 16
        %s165 = scalar_lea.vmem [#allocation2], %s164
        %p166 = pneg %p41
        %p167 = pneg %p38
        %p168 = pneg %p62
        %p169 = pneg %p59
        %p170 = pneg %p88
        %p171 = pneg %p85
        %s172 = sand.u32 %s75, 1
        %s173 = scalar_lea.sflag [#allocation4], %s172
        %s174 = sand.u32 %s75, 1
        %s175 = smul.addr %s174, 32
        %s176 = scalar_lea.vmem [#allocation7], %s175
        %s177 = smul.u32 2, %s20
        %s178 = smul.u32 2, %s20
        %v179 = vld [vmem:[%s152] sm:$0xff]
        %v180 = vld [vmem:[%s152 + $0x8] sm:$0xff]
        %v181 = vld [vmem:[#allocation5] sm:$0xff]
        %v182 = vld [vmem:[#allocation5 + $0x8] sm:$0xff]
        %v183 = vld [vmem:[#allocation5 + $0x10] sm:$0xff]
        %v184 = vld [vmem:[#allocation5 + $0x18] sm:$0xff]
        %v185 = vld [vmem:[#allocation5 + $0x20] sm:$0xff]
        %v186 = vld [vmem:[#allocation5 + $0x28] sm:$0xff]
        %v187 = vld [vmem:[#allocation5 + $0x30] sm:$0xff]
        %v188 = vld [vmem:[#allocation5 + $0x38] sm:$0xff]
        %v189 = vld [vmem:[#allocation5 + $0x40] sm:$0xff]
        %v190 = vld [vmem:[#allocation5 + $0x48] sm:$0xff]
        %v191 = vld [vmem:[#allocation5 + $0x50] sm:$0xff]
        %v192 = vld [vmem:[#allocation5 + $0x58] sm:$0xff]
        %v193 = vld [vmem:[#allocation5 + $0x60] sm:$0xff]
        %v194 = vld [vmem:[#allocation5 + $0x68] sm:$0xff]
        %v195 = vld [vmem:[#allocation5 + $0x70] sm:$0xff]
        %v196 = vld [vmem:[#allocation5 + $0x78] sm:$0xff]
        %v197 = vld [vmem:[#allocation5 + $0x80] sm:$0xff]
        %v198 = vld [vmem:[#allocation5 + $0x88] sm:$0xff]
        %v199 = vld [vmem:[#allocation5 + $0x90] sm:$0xff]
        %v200 = vld [vmem:[#allocation5 + $0x98] sm:$0xff]
        %v201 = vld [vmem:[#allocation5 + $0xa0] sm:$0xff]
        %v202 = vld [vmem:[#allocation5 + $0xa8] sm:$0xff]
        %v203 = vld [vmem:[#allocation5 + $0xb0] sm:$0xff]
        %v204 = vld [vmem:[#allocation5 + $0xb8] sm:$0xff]
        %v205 = vld [vmem:[#allocation5 + $0xc0] sm:$0xff]
        %v206 = vld [vmem:[#allocation5 + $0xc8] sm:$0xff]
        %v207 = vld [vmem:[#allocation5 + $0xd0] sm:$0xff]
        %v208 = vld [vmem:[#allocation5 + $0xd8] sm:$0xff]
        %v209 = vld [vmem:[#allocation5 + $0xe0] sm:$0xff]
        %v210 = vld [vmem:[#allocation5 + $0xe8] sm:$0xff]
        %v211 = vld [vmem:[#allocation5 + $0xf0] sm:$0xff]
        %v212 = vld [vmem:[#allocation5 + $0xf8] sm:$0xff]
        %213 = vmatprep.subr.mxu0 %v212
        %214 = vmatpush1.msra.mxu0 %v211
        %215 = vmatprep.subr.mxu0 %v210
        %216 = vmatpush1.msra.mxu0 %v209
        %217 = vmatprep.subr.mxu0 %v208
        %218 = vmatpush1.msra.mxu0 %v207
        %219 = vmatprep.subr.mxu0 %v206
        %220 = vmatpush1.msra.mxu0 %v205
        %221 = vmatprep.subr.mxu0 %v204
        %222 = vmatpush1.msra.mxu0 %v203
        %223 = vmatprep.subr.mxu0 %v202
        %224 = vmatpush1.msra.mxu0 %v201
        %225 = vmatprep.subr.mxu0 %v200
        %226 = vmatpush1.msra.mxu0 %v199
        %227 = vmatprep.subr.mxu0 %v198
        %228 = vmatpush1.msra.mxu0 %v197
        %229 = vmatprep.subr.mxu0 %v196
        %230 = vmatpush1.msra.mxu0 %v195
        %231 = vmatprep.subr.mxu0 %v194
        %232 = vmatpush1.msra.mxu0 %v193
        %233 = vmatprep.subr.mxu0 %v192
        %234 = vmatpush1.msra.mxu0 %v191
        %235 = vmatprep.subr.mxu0 %v190
        %236 = vmatpush1.msra.mxu0 %v189
        %237 = vmatprep.subr.mxu0 %v188
        %238 = vmatpush1.msra.mxu0 %v187
        %239 = vmatprep.subr.mxu0 %v186
        %240 = vmatpush1.msra.mxu0 %v185
        %241 = vmatprep.subr.mxu0 %v184
        %242 = vmatpush1.msra.mxu0 %v183
        %243 = vmatprep.subr.mxu0 %v182
        %244 = vmatpush1.msra.mxu0 %v181
        %245 = vmatprep.subr.mxu0 0.0
        %246 = vmatpush2.msra.mxu0 0.0
        %247 = vmatprep.subr.mxu0 0.0
        %248 = vmatpush2.msra.mxu0 0.0
        %249 = vmatprep.subr.mxu0 0.0
        %250 = vmatpush2.msra.mxu0 0.0
        %251 = vmatprep.subr.mxu0 0.0
        %252 = vmatpush2.msra.mxu0 0.0
        %253 = vmatprep.subr.mxu0 0.0
        %254 = vmatpush2.msra.mxu0 0.0
        %255 = vmatprep.subr.mxu0 0.0
        %256 = vmatpush2.msra.mxu0 0.0
        %257 = vmatprep.subr.mxu0 0.0
        %258 = vmatpush2.msra.mxu0 0.0
        %259 = vmatprep.subr.mxu0 0.0
        %260 = vmatpush2.msra.mxu0 0.0
        %261 = vmatprep.subr.mxu0 0.0
        %262 = vmatpush2.msra.mxu0 0.0
        %263 = vmatprep.subr.mxu0 0.0
        %264 = vmatpush2.msra.mxu0 0.0
        %265 = vmatprep.subr.mxu0 0.0
        %266 = vmatpush2.msra.mxu0 0.0
        %267 = vmatprep.subr.mxu0 0.0
        %268 = vmatpush2.msra.mxu0 0.0
        %269 = vmatprep.subr.mxu0 0.0
        %270 = vmatpush2.msra.mxu0 0.0
        %271 = vmatprep.subr.mxu0 0.0
        %272 = vmatpush2.msra.mxu0 0.0
        %273 = vmatprep.subr.mxu0 0.0
        %274 = vmatpush2.msra.mxu0 0.0
        %275 = vmatprep.subr.mxu0 0.0
        %276 = vmatpush2.msra.mxu0 0.0
        %277 = vmatprep.mubr.f32.mxu0 0.0
        %278 = vmatmul.mubr.f32.gmra.mxu0 %v179
        %v279 = vpop.f32.mrf.mxu0
        %v280 = vadd.f32 0.0, %v279
        %v281 = vpop.f32.mrf.mxu0
        %v282 = vadd.f32 0.0, %v281
        %283 = vmatprep.mubr.f32.mxu0 0.0
        %284 = vmatmul.mubr.f32.gmra.mxu0 %v180
        %v285 = vpop.f32.mrf.mxu0
        %v286 = vadd.f32 0.0, %v285
        %v287 = vpop.f32.mrf.mxu0
        %v288 = vadd.f32 0.0, %v287
        %289 = vdwg.mxu0
        %290 = vst [vmem:[%s176] sm:$0xff] %v280
        %291 = vst [vmem:[%s176 + $0x8] sm:$0xff] %v282
        %292 = vst [vmem:[%s176 + $0x10] sm:$0xff] %v286
        %293 = vst [vmem:[%s176 + $0x18] sm:$0xff] %v288
        %s294 = sand.u32 %s75, 1
        %s295 = scalar_lea.sflag [#allocation4], %s294
        %s296 = sand.u32 %s75, 1
        %s297 = smul.addr %s296, 32
        %s298 = scalar_lea.vmem [#allocation7], %s297
        // Predicated region
        $region37: #{tpu_custom_call.1} parent=27 // pred_check
          %p299 = pneg %p85
        $region38: #{tpu_custom_call.1} parent=27 // pred_check_branch
          %301 = sbr.rel (%p299) target = $region40
        $region39: #{tpu_custom_call.1} parent=27 // pred_region
          %s302 = smul.u32 2, %s20
          %s304 = ssub.s32 512, 512
          %305 = vsyncadd %s295, %s304
          %s306 = smul.addr %s302, 2
          %s307 = smul.addr %s306, 128
          %s308 = scalar_lea.hbm %s2, %s307
          %s309 = sshll.u32 %s298, 4
          %s310 = int_to_ptr.vmem [resolvable:$true] %s309
          %315 = dma.vmem_to_hbm [thread:$0]  %s310, 512, %s308, %s295, 256, 256, 16
        $region40: #{tpu_custom_call.1} parent=27 // pred_fallthru
          _
      $region28: #{tpu_custom_call.1} parent=5 // pred_fallthru
        _
      %p316 = scmp.le.s32.totalorder 2, %s15
      // Predicated region
      $region41: #{tpu_custom_call.1} parent=5 // pred_check
        %p317 = pneg %p316
      $region42: #{tpu_custom_call.1} parent=5 // pred_check_branch
        %319 = sbr.rel (%p317) target = $region44
      $region43: #{tpu_custom_call.1} parent=5 // pred_region
        %s320 = ssub.s32 %s15, 2
        // Predicated region
        $region45: #{tpu_custom_call.1} parent=43 // pred_check
          %p321 = pneg %p91
        $region46: #{tpu_custom_call.1} parent=43 // pred_check_branch
          %323 = sbr.rel (%p321) target = $region48
        $region47: #{tpu_custom_call.1} parent=43 // pred_region
          %s324 = sand.u32 %s76, 1
          %s325 = scalar_lea.sflag [#allocation4], %s324
          %s326 = sand.u32 %s76, 1
          %s327 = smul.addr %s326, 32
          %s328 = scalar_lea.vmem [#allocation7], %s327
          %329 = dma.done %s325, 512
        $region48: #{tpu_custom_call.1} parent=43 // pred_fallthru
          _
      $region44: #{tpu_custom_call.1} parent=5 // pred_fallthru
        _
    $region6: #{tpu_custom_call.1} parent=1 // loop_footer
      %s19 = sadd.s32 1, %s15
    $region7: #{tpu_custom_call.1} parent=1 // loop_footer_branch
      %14 = sbr.rel target = $region3
    $region8: #{tpu_custom_call.1} parent=1 // loop_exit
      _
    %330 = vsyncpa [#allocation3], 1
    %s331 = scalar_lea.sflag [#allocation3], 1
    %332 = vsyncpa %s331, 1
    %333 = vsyncpa [#allocation6], 1
    %334 = vsyncpa [#allocation4], 1
    %s335 = scalar_lea.sflag [#allocation4], 1
    %336 = vsyncpa %s335, 1

</llo_original>
